<compile_context>
chip_gen: v7x
topology: tpu7x:2x2x1
jax: 0.10.0
libtpu: 0.0.40
codegen_flags: <defaults>
</compile_context>

<pallas_src>
import math

import jax
import jax.numpy as jnp
import numpy as np
from jax.experimental import pallas as pl
from jax.experimental.pallas import tpu as pltpu

S = 64.0
MARGIN = 0.5
COS_M_S = math.cos(MARGIN) * S   # *s folded into the constants (perf review)
SIN_M_S = math.sin(MARGIN) * S


def _arcface_z(x):
    """cos(arccos(x) + margin) * s without arccos/cos, computed in f32.

    Note: sqrt(max(1 - x*x, 0)) silently clamps |x| slightly > 1 where the
    PyTorch arccos reference would produce NaN (benign divergence).
    """
    x = x.astype(jnp.float32)
    sin_theta = jnp.sqrt(jnp.maximum(1.0 - x * x, 0.0))
    return x * COS_M_S - sin_theta * SIN_M_S


def arcface_kernel(x_ref, tgt_ref, loss_ref, m_ref, l_ref):
    kc = pl.program_id(1)                        # class (reduction) axis, last

    @pl.when(kc == 0)
    def _init():
        m_ref[...] = jnp.full(m_ref.shape, -jnp.inf, jnp.float32)
        l_ref[...] = jnp.zeros(l_ref.shape, jnp.float32)

    z = _arcface_z(x_ref[...])                   # (tb, tc) margin-adjusted logits

    # Online logsumexp update for this class tile.
    m_prev = m_ref[...]
    m_new = jnp.maximum(m_prev, jnp.max(z, axis=-1, keepdims=True))
    l_ref[...] = (l_ref[...] * jnp.exp(m_prev - m_new)
                  + jnp.sum(jnp.exp(z - m_new), axis=-1, keepdims=True))
    m_ref[...] = m_new

    @pl.when(kc == pl.num_programs(1) - 1)
    def _finalize():
        z_t = _arcface_z(tgt_ref[...])           # (tb, 1) target-class logit
        lse = m_ref[...] + jnp.log(l_ref[...])
        # TODO(synk): lane-dense (1, tb) output layout; write volume is only
        # B*4 bytes total so the win is negligible next to the B*C stream.
        loss_ref[...] = (lse - z_t).astype(loss_ref.dtype)


def arcface_loss(logits, labels, *, block_b=128, block_c=8192,
                 cast_to_bf16=False):
    """logits: (B, C) f32/bf16 cosines; labels: (B,) int. Returns scalar f32 sum."""
    B, C = logits.shape
    labels = labels.astype(jnp.int32)

    # Tiny (B,) gather of each row's target cosine -- keeps labels and target
    # extraction out of the hot loop.  (Review item: verify in the trace this
    # doesn't re-stream logits; only then switch to a num_scalar_prefetch=1
    # label path with extraction on the owning class tile.)
    tgt = jnp.take_along_axis(logits, labels[:, None], axis=1)        # (B, 1)

    if cast_to_bf16 and logits.dtype == jnp.float32:
        # Halves the B*C bytes streamed from HBM (memory-bound kernel), but
        # changes numerics vs. the f32 reference -- validate tolerance first.
        logits = logits.astype(jnp.bfloat16)
        tgt = tgt.astype(jnp.bfloat16)

    itemsize = jnp.dtype(logits.dtype).itemsize
    sub_mult = 8 * (4 // itemsize)          # sublane packing: 8 for f32, 16 for bf16

    # --- Tile selection ------------------------------------------------------
    tb = min(block_b, B)
    # Guarantee >= 2 batch blocks when B allows so the "parallel" axis shards
    # across both v7x TensorCores.
    if B // tb < 2 and B % 2 == 0 and (B // 2) % sub_mult == 0:
        tb = B // 2
    tc = min(block_c, C)
    assert B % tb == 0 and C % tc == 0, (B, C, tb, tc)
    # TODO(synk): pad/mask ragged batch/class tails; class-tail padding must map
    # to -inf in z so it doesn't perturb the logsumexp.

    # --- VMEM budget: double-buffered logits tile + small lane-padded tiles for
    # tgt/out/scratch + headroom; capped well under v7x's 64 MiB VMEM. ---------
    logits_tile = tb * tc * itemsize
    small_tiles = 6 * tb * 128 * 4
    vmem_limit = int(min(48 * 1024 * 1024,
                         2 * logits_tile + small_tiles + (4 << 20)))

    per_row = pl.pallas_call(
        arcface_kernel,
        out_shape=jax.ShapeDtypeStruct((B, 1), jnp.float32),
        grid_spec=pltpu.PrefetchScalarGridSpec(
            num_scalar_prefetch=0,
            grid=(B // tb, C // tc),                              # reduction last
            in_specs=[
                pl.BlockSpec((tb, tc), lambda bi, kc: (bi, kc)),  # logits tile
                pl.BlockSpec((tb, 1), lambda bi, kc: (bi, 0)),    # target cosines
            ],
            out_specs=pl.BlockSpec((tb, 1), lambda bi, kc: (bi, 0)),
            scratch_shapes=[pltpu.VMEM((tb, 1), jnp.float32),     # running max m
                            pltpu.VMEM((tb, 1), jnp.float32)],    # running sum l
        ),
        compiler_params=pltpu.CompilerParams(
            dimension_semantics=("parallel", "arbitrary"),
            vmem_limit_bytes=vmem_limit,
        ),
        cost_estimate=pl.CostEstimate(
            flops=8 * B * C,
            transcendentals=2 * B * C,                            # sqrt + exp
            bytes_accessed=B * C * itemsize + B * (itemsize + 4),
        ),
    )(logits, tgt)

    # B-element final reduction (the reference returns loss.sum()).
    return jnp.sum(per_row)


def arcface_loss_ref(logits, labels):
    """Pure-JAX reference mirroring the PyTorch module exactly."""
    z = jnp.cos(jnp.arccos(logits.astype(jnp.float32)) + MARGIN) * S
    lse = jax.scipy.special.logsumexp(z, axis=-1)
    tgt = jnp.take_along_axis(z, labels[:, None], axis=-1)[:, 0]
    return jnp.sum(lse - tgt)


if __name__ == "__main__":
    B, C = 16, 512            # small test shape; tiles below force a 2x2 grid
    key = jax.random.PRNGKey(0)
    k1, k2 = jax.random.split(key)
    # Valid cosine-similarity logits, strictly inside [-1, 1].
    logits = jax.random.uniform(k1, (B, C), jnp.float32, minval=-0.99, maxval=0.99)
    labels = jax.random.randint(k2, (B,), 0, C, dtype=jnp.int32)

    loss = jax.block_until_ready(arcface_loss(logits, labels, block_b=8, block_c=256))
    ref = jax.block_until_ready(arcface_loss_ref(logits, labels))

    assert np.allclose(np.asarray(loss), np.asarray(ref), rtol=1e-4, atol=1e-2), (
        loss, ref)
    print("KERNEL_OK")
</pallas_src>

<mosaic_0001>
module attributes {stable_mosaic.version = 11 : i64} {
  func.func @arcface_kernel(%arg0: i32, %arg1: i32, %arg2: memref<8x256xf32, #tpu.memory_space<vmem>>, %arg3: memref<8x1xf32, #tpu.memory_space<vmem>>, %arg4: memref<8x1xf32, #tpu.memory_space<vmem>>, %arg5: memref<8x1xf32, #tpu.memory_space<vmem>>, %arg6: memref<8x1xf32, #tpu.memory_space<vmem>>) attributes {dimension_semantics = [#tpu.dimension_semantics<parallel>, #tpu.dimension_semantics<arbitrary>], iteration_bounds = array<i64: 2, 2>, scalar_prefetch = 0 : i64, scratch_operands = 2 : i64, tpu.core_type = #tpu.core_type<tc>, window_params = [{transform_indices = @transform_0, window_bounds = array<i64: 8, 256>}, {transform_indices = @transform_1, window_bounds = array<i64: 8, 1>}, {transform_indices = @transform_2, window_bounds = array<i64: 8, 1>}]} {
    %c0_i32 = arith.constant 0 : i32
    %0 = arith.cmpi eq, %arg1, %c0_i32 : i32
    %1 = arith.extui %0 : i1 to i32
    %c0_i32_0 = arith.constant 0 : i32
    %2 = arith.cmpi ne, %1, %c0_i32_0 : i32
    scf.if %2 {
      %cst_16 = arith.constant 0xFF800000 : f32
      %34 = vector.broadcast %cst_16 : f32 to vector<8x1xf32>
      %c0_17 = arith.constant 0 : index
      %c0_18 = arith.constant 0 : index
      %35 = vector.load %arg5[%c0_17, %c0_18] : memref<8x1xf32, #tpu.memory_space<vmem>>, vector<8x1xf32>
      tpu.vector_store %arg5[%c0_17, %c0_18], %34 {strides = array<i32>} : memref<8x1xf32, #tpu.memory_space<vmem>>, vector<8x1xf32>,
      %cst_19 = arith.constant 0.000000e+00 : f32
      %36 = vector.broadcast %cst_19 : f32 to vector<8x1xf32>
      %c0_20 = arith.constant 0 : index
      %c0_21 = arith.constant 0 : index
      %37 = vector.load %arg6[%c0_20, %c0_21] : memref<8x1xf32, #tpu.memory_space<vmem>>, vector<8x1xf32>
      tpu.vector_store %arg6[%c0_20, %c0_21], %36 {strides = array<i32>} : memref<8x1xf32, #tpu.memory_space<vmem>>, vector<8x1xf32>,
    } else {
    }
    %c0 = arith.constant 0 : index
    %c0_1 = arith.constant 0 : index
    %3 = vector.load %arg2[%c0, %c0_1] : memref<8x256xf32, #tpu.memory_space<vmem>>, vector<8x256xf32>
    %4 = arith.mulf %3, %3 : vector<8x256xf32>
    %cst = arith.constant 1.000000e+00 : f32
    %5 = vector.broadcast %cst : f32 to vector<8x256xf32>
    %6 = arith.subf %5, %4 : vector<8x256xf32>
    %cst_2 = arith.constant 0.000000e+00 : f32
    %7 = vector.broadcast %cst_2 : f32 to vector<8x256xf32>
    %8 = arith.maximumf %6, %7 : vector<8x256xf32>
    %9 = math.sqrt %8 : vector<8x256xf32>
    %cst_3 = arith.constant 56.1652832 : f32
    %10 = vector.broadcast %cst_3 : f32 to vector<8x256xf32>
    %11 = arith.mulf %3, %10 : vector<8x256xf32>
    %cst_4 = arith.constant 30.6832352 : f32
    %12 = vector.broadcast %cst_4 : f32 to vector<8x256xf32>
    %13 = arith.mulf %9, %12 : vector<8x256xf32>
    %14 = arith.subf %11, %13 : vector<8x256xf32>
    %c0_5 = arith.constant 0 : index
    %c0_6 = arith.constant 0 : index
    %15 = vector.load %arg5[%c0_5, %c0_6] : memref<8x1xf32, #tpu.memory_space<vmem>>, vector<8x1xf32>
    %cst_7 = arith.constant dense<0xFF800000> : vector<8xf32>
    %16 = vector.multi_reduction <maximumf>, %14, %cst_7 [1] : vector<8x256xf32> to vector<8xf32>
    %17 = vector.shape_cast %16 : vector<8xf32> to vector<8x1xf32>
    %18 = arith.maximumf %15, %17 : vector<8x1xf32>
    %c0_8 = arith.constant 0 : index
    %c0_9 = arith.constant 0 : index
    %19 = vector.load %arg6[%c0_8, %c0_9] : memref<8x1xf32, #tpu.memory_space<vmem>>, vector<8x1xf32>
    %20 = arith.subf %15, %18 : vector<8x1xf32>
    %21 = math.exp %20 : vector<8x1xf32>
    %22 = arith.mulf %19, %21 : vector<8x1xf32>
    %23 = vector.broadcast %18 : vector<8x1xf32> to vector<8x256xf32>
    %24 = arith.subf %14, %23 : vector<8x256xf32>
    %25 = math.exp %24 : vector<8x256xf32>
    %cst_10 = arith.constant dense<0.000000e+00> : vector<8xf32>
    %26 = vector.multi_reduction <add>, %25, %cst_10 [1] : vector<8x256xf32> to vector<8xf32>
    %27 = vector.shape_cast %26 : vector<8xf32> to vector<8x1xf32>
    %28 = arith.addf %22, %27 : vector<8x1xf32>
    %c0_11 = arith.constant 0 : index
    %c0_12 = arith.constant 0 : index
    %29 = vector.load %arg6[%c0_11, %c0_12] : memref<8x1xf32, #tpu.memory_space<vmem>>, vector<8x1xf32>
    tpu.vector_store %arg6[%c0_11, %c0_12], %28 {strides = array<i32>} : memref<8x1xf32, #tpu.memory_space<vmem>>, vector<8x1xf32>,
    %c0_13 = arith.constant 0 : index
    %c0_14 = arith.constant 0 : index
    %30 = vector.load %arg5[%c0_13, %c0_14] : memref<8x1xf32, #tpu.memory_space<vmem>>, vector<8x1xf32>
    tpu.vector_store %arg5[%c0_13, %c0_14], %18 {strides = array<i32>} : memref<8x1xf32, #tpu.memory_space<vmem>>, vector<8x1xf32>,
    %c1_i32 = arith.constant 1 : i32
    %31 = arith.cmpi eq, %arg1, %c1_i32 : i32
    %32 = arith.extui %31 : i1 to i32
    %c0_i32_15 = arith.constant 0 : i32
    %33 = arith.cmpi ne, %32, %c0_i32_15 : i32
    scf.if %33 {
      %c0_16 = arith.constant 0 : index
      %c0_17 = arith.constant 0 : index
      %34 = vector.load %arg3[%c0_16, %c0_17] : memref<8x1xf32, #tpu.memory_space<vmem>>, vector<8x1xf32>
      %35 = arith.mulf %34, %34 : vector<8x1xf32>
      %cst_18 = arith.constant 1.000000e+00 : f32
      %36 = vector.broadcast %cst_18 : f32 to vector<8x1xf32>
      %37 = arith.subf %36, %35 : vector<8x1xf32>
      %cst_19 = arith.constant 0.000000e+00 : f32
      %38 = vector.broadcast %cst_19 : f32 to vector<8x1xf32>
      %39 = arith.maximumf %37, %38 : vector<8x1xf32>
      %40 = math.sqrt %39 : vector<8x1xf32>
      %cst_20 = arith.constant 56.1652832 : f32
      %41 = vector.broadcast %cst_20 : f32 to vector<8x1xf32>
      %42 = arith.mulf %34, %41 : vector<8x1xf32>
      %cst_21 = arith.constant 30.6832352 : f32
      %43 = vector.broadcast %cst_21 : f32 to vector<8x1xf32>
      %44 = arith.mulf %40, %43 : vector<8x1xf32>
      %45 = arith.subf %42, %44 : vector<8x1xf32>
      %c0_22 = arith.constant 0 : index
      %c0_23 = arith.constant 0 : index
      %46 = vector.load %arg5[%c0_22, %c0_23] : memref<8x1xf32, #tpu.memory_space<vmem>>, vector<8x1xf32>
      %c0_24 = arith.constant 0 : index
      %c0_25 = arith.constant 0 : index
      %47 = vector.load %arg6[%c0_24, %c0_25] : memref<8x1xf32, #tpu.memory_space<vmem>>, vector<8x1xf32>
      %48 = math.log %47 : vector<8x1xf32>
      %49 = arith.addf %46, %48 : vector<8x1xf32>
      %50 = arith.subf %49, %45 : vector<8x1xf32>
      %c0_26 = arith.constant 0 : index
      %c0_27 = arith.constant 0 : index
      %51 = vector.load %arg4[%c0_26, %c0_27] : memref<8x1xf32, #tpu.memory_space<vmem>>, vector<8x1xf32>
      tpu.vector_store %arg4[%c0_26, %c0_27], %50 {strides = array<i32>} : memref<8x1xf32, #tpu.memory_space<vmem>>, vector<8x1xf32>,
    } else {
    }
    return
  }
  func.func @transform_0(%arg0: i32, %arg1: i32) -> (i32, i32) {
    %c0_i32 = arith.constant 0 : i32
    return %arg0, %arg1 : i32, i32
  }
  func.func @transform_1(%arg0: i32, %arg1: i32) -> (i32, i32) {
    %c0_i32 = arith.constant 0 : i32
    %c0_i32_0 = arith.constant 0 : i32
    return %arg0, %c0_i32 : i32, i32
  }
  func.func @transform_2(%arg0: i32, %arg1: i32) -> (i32, i32) {
    %c0_i32 = arith.constant 0 : i32
    %c0_i32_0 = arith.constant 0 : i32
    return %arg0, %c0_i32 : i32, i32
  }
}

</mosaic_0001>

<llo_original>
// kernel: tpu_custom_call.1
$region0: #{tpu_custom_call.1}
  #allocation0 [shape = 'u32[]', space=smem, size = 0x4, offset = 0x4, fixed_abs, tag = 'smem constant byte address 0x4 - core index']
  #allocation1 [shape = 'u32[144,128]{1,0:T(1,128)}', space=vmem, size = 0x12000, scoped, tag = 'internal scratch']
  #allocation2 [shape = 'f32[8,1]{1,0:T(8,128)}', space=vmem, size = 0x1000, scoped, tag = 'scratch operand']
  #allocation3 [shape = 'f32[8,1]{1,0:T(8,128)}', space=vmem, size = 0x1000, scoped, tag = 'scratch operand']
  %s0 = inlined_call_operand.hbm [shape: f32[16,512], index: 0, kind: input, shape index: {}]
  %s1 = inlined_call_operand.vmem [shape: f32[16,1], index: 1, kind: input, shape index: {}]
  %s2 = inlined_call_operand.vmem [shape: f32[16,1], index: 2, kind: output, shape index: {}]
  %s3 = sld [smem:[#allocation0]]
  $region53: #{tpu_custom_call.1} parent=0
    _
  %s5 = ssub.s32 1, %s3
  %s6 = scalar_select 0, %s5, %s3
  $region1: #{tpu_custom_call.1} parent=0
    #allocation4 [shape = 'u8[16384]{0}', space=vmem, size = 0x4000, scoped, tag = 'input window, operand 0']
    #allocation5 [shape = 's32[2]{0}', space=sflag, size = 0x8, scoped, tag = 'scoped memory for tpu_custom_call.1']
    %7 = vsyncpa [#allocation5], 0
    %s8 = scalar_lea.sflag [#allocation5], 1
    %9 = vsyncpa %s8, 0
    loop: start=0, step=1, limit=6
    $region2: #{tpu_custom_call.1} parent=1 // loop_pre_header
      _
    $region3: #{tpu_custom_call.1} parent=1 // loop_header
      %s11 = sphi 0, %s15
      %p12 = scmp.ge.s32.totalorder %s11, 6
      %s18 = sphi 0, %s30
      %s19 = sphi 0, %s26
      %s20 = sphi 0, %s18
      %s21 = sphi 0, %s19
      %s22 = sphi 0, %s20
      %s23 = sphi 0, %s21
      %s35 = sphi 0, %s37
      %s38 = sphi 0, %s35
      %s39 = sphi 0, %s38
      %s55 = sphi 0, %s39
      %s61 = sphi 0, %s63
      %s64 = sphi 0, %s61
      %s65 = sphi 0, %s64
      %s81 = sphi 0, %s65
      %s87 = sphi 0, %s89
      %s90 = sphi 0, %s87
      %s91 = sphi 0, %s90
      %s107 = sphi 0, %s91
    $region4: #{tpu_custom_call.1} parent=1 // loop_header_branch
      %14 = sbr.rel (%p12) target = $region8
    $region5: #{tpu_custom_call.1} parent=1 // loop_body
      %s16 = ssub.s32 %s11, 1
      %s17 = ssub.s32 %s11, 2
      %s24 = sadd.s32 1, %s19
      %p25 = scmp.ge.s32.totalorder %s24, 2
      %s26 = scalar_select %p25, 0, %s24
      %s27 = sadd.s32 1, %s18
      %s28 = scalar_select %p25, %s27, %s18
      %p29 = scmp.ge.s32.totalorder %s28, 2
      %s30 = scalar_select %p29, 0, %s28
      %s31 = ssub.s32 %s18, %s30
      %s32 = ssub.s32 %s19, %s26
      %s33 = sor.u32 %s31, %s32
      %p34 = scmp.eq.s32.totalorder %s33, 0
      %s36 = sadd.s32 %s35, 1
      %s37 = scalar_select %p34, %s35, %s36
      %p40 = pneg %p34
      %p41 = scmp.eq.s32.totalorder %s11, 3
      %p42 = por %p40, %p41
      %p43 = scmp.ne.s32.totalorder %s35, %s38
      %p44 = scmp.eq.s32.totalorder %s11, 0
      %p45 = por %p43, %p44
      %p46 = scmp.ne.s32.totalorder %s35, %s38
      %p47 = scmp.eq.s32.totalorder %s16, 3
      %p48 = por %p46, %p47
      %p49 = scmp.ne.s32.totalorder %s38, %s39
      %p50 = scmp.eq.s32.totalorder %s16, 0
      %p51 = por %p49, %p50
      %p52 = scmp.ne.s32.totalorder %s38, %s39
      %p53 = scmp.eq.s32.totalorder %s17, 3
      %p54 = por %p52, %p53
      %p56 = scmp.ne.s32.totalorder %s39, %s55
      %p57 = scmp.eq.s32.totalorder %s17, 0
      %p58 = por %p56, %p57
      %s59 = ssub.s32 %s18, %s30
      %p60 = scmp.eq.s32.totalorder %s59, 0
      %s62 = sadd.s32 %s61, 1
      %s63 = scalar_select %p60, %s61, %s62
      %p66 = pneg %p60
      %p67 = scmp.eq.s32.totalorder %s11, 3
      %p68 = por %p66, %p67
      %p69 = scmp.ne.s32.totalorder %s61, %s64
      %p70 = scmp.eq.s32.totalorder %s11, 0
      %p71 = por %p69, %p70
      %p72 = scmp.ne.s32.totalorder %s61, %s64
      %p73 = scmp.eq.s32.totalorder %s16, 3
      %p74 = por %p72, %p73
      %p75 = scmp.ne.s32.totalorder %s64, %s65
      %p76 = scmp.eq.s32.totalorder %s16, 0
      %p77 = por %p75, %p76
      %p78 = scmp.ne.s32.totalorder %s64, %s65
      %p79 = scmp.eq.s32.totalorder %s17, 3
      %p80 = por %p78, %p79
      %p82 = scmp.ne.s32.totalorder %s65, %s81
      %p83 = scmp.eq.s32.totalorder %s17, 0
      %p84 = por %p82, %p83
      %s85 = ssub.s32 %s18, %s30
      %p86 = scmp.eq.s32.totalorder %s85, 0
      %s88 = sadd.s32 %s87, 1
      %s89 = scalar_select %p86, %s87, %s88
      %p92 = pneg %p86
      %p93 = scmp.eq.s32.totalorder %s11, 3
      %p94 = por %p92, %p93
      %p95 = scmp.ne.s32.totalorder %s87, %s90
      %p96 = scmp.eq.s32.totalorder %s11, 0
      %p97 = por %p95, %p96
      %p98 = scmp.ne.s32.totalorder %s87, %s90
      %p99 = scmp.eq.s32.totalorder %s16, 3
      %p100 = por %p98, %p99
      %p101 = scmp.ne.s32.totalorder %s90, %s91
      %p102 = scmp.eq.s32.totalorder %s16, 0
      %p103 = por %p101, %p102
      %p104 = scmp.ne.s32.totalorder %s90, %s91
      %p105 = scmp.eq.s32.totalorder %s17, 3
      %p106 = por %p104, %p105
      %p108 = scmp.ne.s32.totalorder %s91, %s107
      %p109 = scmp.eq.s32.totalorder %s17, 0
      %p110 = por %p108, %p109
      %p111 = scmp.le.s32.totalorder 1, %s11
      %p112 = scmp.lt.s32.totalorder %s11, 5
      %p113 = pnand %p111, %p112
      %p114 = pneg %p113
      // Predicated region
      $region9: #{tpu_custom_call.1} parent=5 // pred_check
        _
      $region10: #{tpu_custom_call.1} parent=5 // pred_check_branch
        %116 = sbr.rel (%p113) target = $region12
      $region11: #{tpu_custom_call.1} parent=5 // pred_region
        %s117 = ssub.s32 %s11, 1
      $region12: #{tpu_custom_call.1} parent=5 // pred_fallthru
        _
      %p118 = scmp.lt.s32.totalorder %s11, 4
      // Predicated region
      $region13: #{tpu_custom_call.1} parent=5 // pred_check
        %p119 = pneg %p118
      $region14: #{tpu_custom_call.1} parent=5 // pred_check_branch
        %121 = sbr.rel (%p119) target = $region16
      $region15: #{tpu_custom_call.1} parent=5 // pred_region
        // Predicated region
        $region17: #{tpu_custom_call.1} parent=15 // pred_check
          %p122 = pneg %p45
        $region18: #{tpu_custom_call.1} parent=15 // pred_check_branch
          %124 = sbr.rel (%p122) target = $region20
        $region19: #{tpu_custom_call.1} parent=15 // pred_region
          %s125 = sand.u32 %s35, 1
          %s126 = scalar_lea.sflag [#allocation5], %s125
          %s127 = sand.u32 %s35, 1
          %s128 = smul.addr %s127, 16
          %s129 = scalar_lea.vmem [#allocation4], %s128
          %s130 = smul.u32 2, %s19
          %s132 = ssub.s32 256, 256
          %133 = vsyncadd %s126, %s132
          %s134 = smul.addr %s18, 4
          %s135 = sadd.s32 %s130, %s134
          %s136 = smul.addr %s135, 128
          %s137 = scalar_lea.hbm %s0, %s136
          %s139 = sshll.u32 %s129, 4
          %s140 = int_to_ptr.vmem [resolvable:$true] %s139
          %142 = dma.hbm_to_vmem [thread:$0]  %s137, 256, %s140, %s126
        $region20: #{tpu_custom_call.1} parent=15 // pred_fallthru
          _
        // Predicated region
        $region21: #{tpu_custom_call.1} parent=15 // pred_check
          %p143 = pneg %p71
        $region22: #{tpu_custom_call.1} parent=15 // pred_check_branch
          %145 = sbr.rel (%p143) target = $region24
        $region23: #{tpu_custom_call.1} parent=15 // pred_region
          %p146 = scmp.lt.s32.totalorder %s18, 1
          %s147 = scalar_select %p146, %s18, 1
          %s148 = smul.addr %s147, 8
          %s149 = scalar_lea.vmem %s1, %s148
        $region24: #{tpu_custom_call.1} parent=15 // pred_fallthru
          _
      $region16: #{tpu_custom_call.1} parent=5 // pred_fallthru
        _
      %p150 = scmp.le.s32.totalorder 1, %s11
      %p151 = scmp.lt.s32.totalorder %s11, 5
      %p152 = pnand %p150, %p151
      %p153 = pneg %p152
      // Predicated region
      $region25: #{tpu_custom_call.1} parent=5 // pred_check
        _
      $region26: #{tpu_custom_call.1} parent=5 // pred_check_branch
        %155 = sbr.rel (%p152) target = $region28
      $region27: #{tpu_custom_call.1} parent=5 // pred_region
        %s156 = ssub.s32 %s11, 1
        %s157 = sand.u32 %s38, 1
        %s158 = scalar_lea.sflag [#allocation5], %s157
        %s159 = sand.u32 %s38, 1
        %s160 = smul.addr %s159, 16
        %s161 = scalar_lea.vmem [#allocation4], %s160
        // Predicated region
        $region29: #{tpu_custom_call.1} parent=27 // pred_check
          %p162 = pneg %p51
        $region30: #{tpu_custom_call.1} parent=27 // pred_check_branch
          %164 = sbr.rel (%p162) target = $region32
        $region31: #{tpu_custom_call.1} parent=27 // pred_region
          %165 = dma.done %s158, 256
        $region32: #{tpu_custom_call.1} parent=27 // pred_fallthru
          _
        %s166 = sand.u32 %s38, 1
        %s167 = scalar_lea.sflag [#allocation5], %s166
        %s168 = sand.u32 %s38, 1
        %s169 = smul.addr %s168, 16
        %s170 = scalar_lea.vmem [#allocation4], %s169
        %p171 = pneg %p51
        %p172 = pneg %p48
        %p173 = scmp.lt.s32.totalorder %s20, 1
        %s174 = scalar_select %p173, %s20, 1
        %s175 = smul.addr %s174, 8
        %s176 = scalar_lea.vmem %s1, %s175
        %p177 = pneg %p77
        %p178 = pneg %p74
        %p179 = pneg %p103
        %p180 = pneg %p100
        %p181 = scmp.lt.s32.totalorder %s20, 1
        %s182 = scalar_select %p181, %s20, 1
        %s183 = smul.addr %s182, 8
        %s184 = scalar_lea.vmem %s2, %s183
        %s185 = smul.u32 2, %s21
        %p186 = scmp.lt.s32.totalorder %s20, 1
        %s187 = scalar_select %p186, %s20, 1
        %s188 = smul.addr %s187, 8
        %s189 = scalar_lea.vmem %s1, %s188
        %p190 = scmp.lt.s32.totalorder %s20, 1
        %s191 = scalar_select %p190, %s20, 1
        %s192 = smul.addr %s191, 8
        %s193 = scalar_lea.vmem %s2, %s192
        %p194 = scmp.eq.s32.totalorder %s21, 0
        // Predicated region
        $region33: #{tpu_custom_call.1} parent=27 // pred_check
          %p195 = pneg %p194
        $region34: #{tpu_custom_call.1} parent=27 // pred_check_branch
          %197 = sbr.rel (%p195) target = $region36
        $region35: #{tpu_custom_call.1} parent=27 // pred_region
          %vm198 = vcmask 7168
          %199 = vst.msk [vmem:[#allocation2] sm:$0xff] %vm198, -inf
          %200 = vst.msk [vmem:[#allocation3] sm:$0xff] %vm198, 0.0
        $region36: #{tpu_custom_call.1} parent=27 // pred_fallthru
          _
        %v201 = vld [vmem:[%s161] sm:$0xff]
        %v202 = vld [vmem:[%s161 + $0x8] sm:$0xff]
        %v203 = vmul.f32 %v201, %v201
        %v204 = vmul.f32 %v202, %v202
        %v205 = vsub.f32 1.0, %v203
        %v206 = vsub.f32 1.0, %v204
        %v207 = vmax.f32 %v205, 0.0
        %v208 = vmax.f32 %v206, 0.0
        %v209 = vrsqrt.pop %v207
        %v210 = vmul.f32 %v207, %v209
        %vm211 = vcmp.eq.f32.partialorder %v207, inf
        %v212 = vsel %vm211, %v207, %v210
        %vm213 = vcmp.eq.f32.partialorder %v207, 0.0
        %v214 = vand.u32 %v207, 2147483648
        %v215 = vsel %vm213, %v214, %v212
        %v216 = vrsqrt.pop %v208
        %v217 = vmul.f32 %v208, %v216
        %vm218 = vcmp.eq.f32.partialorder %v208, inf
        %v219 = vsel %vm218, %v208, %v217
        %vm220 = vcmp.eq.f32.partialorder %v208, 0.0
        %v221 = vand.u32 %v208, 2147483648
        %v222 = vsel %vm220, %v221, %v219
        %v223 = vmul.f32 %v201, 56.165283
        %v224 = vmul.f32 %v202, 56.165283
        %v225 = vmul.f32 %v215, 30.683235
        %v226 = vmul.f32 %v222, 30.683235
        %v227 = vsub.f32 %v223, %v225
        %v228 = vsub.f32 %v224, %v226
        %v229 = vld [vmem:[#allocation2] sm:$0xff]
        %v230 = vmax.f32 %v227, %v228
        %231 = vmax.xlane.f32.xlu0 %v230
        %v232 = vpop.xlane.xlu0 %231
        %v233 = vmax.f32 %v229, %v232
        %v234 = vld [vmem:[#allocation3] sm:$0xff]
        %v235 = vsub.f32 %v229, %v233
        %v236 = vmul.f32 %v235, 1.442695
        %v237 = vpow.pop %v236
        %v238 = vmul.f32 %v234, %v237
        %240 = vset.pattern.permute.xlu0 0
        %241 = vperm.xlu0 %240, %v233
        %v242 = vpop.permute.xlu0 %241
        %v244 = vsub.f32 %v227, %v242
        %v245 = vsub.f32 %v228, %v242
        %v246 = vmul.f32 %v244, 1.442695
        %v247 = vpow.pop %v246
        %v248 = vmul.f32 %v245, 1.442695
        %v249 = vpow.pop %v248
        %v250 = vadd.f32 %v247, %v249
        %251 = vadd.xlane.f32.xlu0 %v250
        %v252 = vpop.xlane.xlu0 %251
        %v253 = vadd.f32 %v238, %v252
        %vm254 = vcmask 7168
        %255 = vst.msk [vmem:[#allocation3] sm:$0xff] %vm254, %v253
        %256 = vst.msk [vmem:[#allocation2] sm:$0xff] %vm254, %v233
        %p257 = scmp.eq.s32.totalorder %s21, 1
        // Predicated region
        $region37: #{tpu_custom_call.1} parent=27 // pred_check
          %p258 = pneg %p257
        $region38: #{tpu_custom_call.1} parent=27 // pred_check_branch
          %260 = sbr.rel (%p258) target = $region40
        $region39: #{tpu_custom_call.1} parent=27 // pred_region
          %v261 = vld [vmem:[%s189] sm:$0xff]
          %v262 = vmul.f32 %v261, %v261
          %v263 = vsub.f32 1.0, %v262
          %v264 = vmax.f32 %v263, 0.0
          %v265 = vrsqrt.pop %v264
          %v266 = vmul.f32 %v264, %v265
          %vm267 = vcmp.eq.f32.partialorder %v264, inf
          %v268 = vsel %vm267, %v264, %v266
          %vm269 = vcmp.eq.f32.partialorder %v264, 0.0
          %v270 = vand.u32 %v264, 2147483648
          %v271 = vsel %vm269, %v270, %v268
          %v272 = vmul.f32 %v261, 56.165283
          %v273 = vmul.f32 %v271, 30.683235
          %v274 = vsub.f32 %v272, %v273
          %v275 = vld [vmem:[#allocation2] sm:$0xff]
          %v276 = vld [vmem:[#allocation3] sm:$0xff]
          %v277 = vlog2.pop %v276
          %v278 = vmul.f32 %v277, 0.6931472
          %v279 = vadd.f32 %v275, %v278
          %v280 = vsub.f32 %v279, %v274
          %281 = vst.msk [vmem:[%s193] sm:$0xff] %vm254, %v280
        $region40: #{tpu_custom_call.1} parent=27 // pred_fallthru
          _
        %p282 = scmp.lt.s32.totalorder %s20, 1
        %s283 = scalar_select %p282, %s20, 1
        %s284 = smul.addr %s283, 8
        %s285 = scalar_lea.vmem %s2, %s284
        // Predicated region
        $region41: #{tpu_custom_call.1} parent=27 // pred_check
          %p286 = pneg %p100
        $region42: #{tpu_custom_call.1} parent=27 // pred_check_branch
          %288 = sbr.rel (%p286) target = $region44
        $region43: #{tpu_custom_call.1} parent=27 // pred_region
          _
        $region44: #{tpu_custom_call.1} parent=27 // pred_fallthru
          _
      $region28: #{tpu_custom_call.1} parent=5 // pred_fallthru
        _
      %p289 = scmp.le.s32.totalorder 2, %s11
      // Predicated region
      $region45: #{tpu_custom_call.1} parent=5 // pred_check
        %p290 = pneg %p289
      $region46: #{tpu_custom_call.1} parent=5 // pred_check_branch
        %292 = sbr.rel (%p290) target = $region48
      $region47: #{tpu_custom_call.1} parent=5 // pred_region
        %s293 = ssub.s32 %s11, 2
        // Predicated region
        $region49: #{tpu_custom_call.1} parent=47 // pred_check
          %p294 = pneg %p106
        $region50: #{tpu_custom_call.1} parent=47 // pred_check_branch
          %296 = sbr.rel (%p294) target = $region52
        $region51: #{tpu_custom_call.1} parent=47 // pred_region
          %p297 = scmp.lt.s32.totalorder %s22, 1
          %s298 = scalar_select %p297, %s22, 1
          %s299 = smul.addr %s298, 8
          %s300 = scalar_lea.vmem %s2, %s299
        $region52: #{tpu_custom_call.1} parent=47 // pred_fallthru
          _
      $region48: #{tpu_custom_call.1} parent=5 // pred_fallthru
        _
    $region6: #{tpu_custom_call.1} parent=1 // loop_footer
      %s15 = sadd.s32 1, %s11
    $region7: #{tpu_custom_call.1} parent=1 // loop_footer_branch
      %10 = sbr.rel target = $region3
    $region8: #{tpu_custom_call.1} parent=1 // loop_exit
      _
    %301 = vsyncpa [#allocation5], 1
    %s302 = scalar_lea.sflag [#allocation5], 1
    %303 = vsyncpa %s302, 1

</llo_original>
